<compile_context>
chip_gen: v6e
topology: v6e:2x2x1
jax: 0.10.0
libtpu: 0.0.40
codegen_flags: <defaults>
</compile_context>

<pallas_src>
import jax
import jax.numpy as jnp
from jax.experimental import pallas as pl
from jax.experimental.pallas import tpu as pltpu

_MAX_LANES = 512                          # lane-width cap (multiple of 128)
_TARGET_TILE_BYTES = 4 * 1024 * 1024      # ~4 MiB tiles per grid step
_VMEM_LIMIT_BYTES = 32 * 1024 * 1024      # explicit scoped VMEM (v5e default is 16 MiB)


def _drop_path_kernel(scale_ref, x_ref, o_ref):
    # scale_ref: SMEM (B,) f32, per-sample scale = mask_b / keep_prob (0 or 1/kp)
    # x_ref / o_ref: VMEM (1, TR, L) lane-dense tile of sample b = program_id(0)
    b = pl.program_id(0)
    s = scale_ref[b]                                   # f32 scalar

    @pl.when(s == 0.0)
    def _dropped():
        # Dropped sample: output is exactly zero.  The input DMA for these
        # tiles was redirected/deduped by the index_map, so don't touch x_ref.
        o_ref[...] = jnp.zeros_like(o_ref)

    @pl.when(s != 0.0)
    def _kept():
        # Multiply in f32 (no scale quantization for bf16 inputs), cast at store.
        o_ref[...] = (x_ref[...].astype(jnp.float32) * s).astype(o_ref.dtype)


def _choose_lanes(n):
    """Largest multiple of 128 (<= _MAX_LANES) that divides n, else None."""
    lanes = _MAX_LANES
    while lanes >= 128:
        if n % lanes == 0:
            return lanes
        lanes -= 128
    return None


def drop_path_pallas(x, drop_prob: float = 0.0, training: bool = False, *,
                     key=None, donate_x: bool = False):
    """Pallas implementation of drop_path. x is NCHW (B, C, H, W); any >=1-D works."""
    if drop_prob == 0.0 or not training:
        return x

    if key is None:
        # TODO(synk): callers should pass a fresh key per training step; the
        # default makes the drop mask deterministic across calls.
        key = jax.random.PRNGKey(0)

    keep_prob = 1.0 - drop_prob
    B = x.shape[0]
    orig_shape = x.shape
    N = 1
    for d in x.shape[1:]:
        N *= d

    # Per-sample keep mask, same construction as the PyTorch reference:
    # floor(keep_prob + U[0,1)) -> 1 with prob keep_prob, 0 with prob drop_prob.
    # Fold 1/keep_prob in so the kernel sees a single prefetched scalar per sample.
    mask = jnp.floor(keep_prob + jax.random.uniform(key, (B,), dtype=jnp.float32))
    scale = mask * jnp.float32(1.0 / keep_prob)        # (B,) f32, values in {0, 1/kp}

    itemsize = jnp.dtype(x.dtype).itemsize

    # ---- Lane-dense view of the per-sample payload (no copies if possible) ---
    L = _choose_lanes(N)
    if L is not None:
        R = N // L
        x3 = x.reshape(B, R, L)                        # metadata-only reshape
        needs_slice = False
    else:
        # Awkward flat length: pad to one multiple of 128 (only copying path).
        L = 128
        R = pl.cdiv(N, L)
        x3 = jnp.pad(x.reshape(B, N), ((0, 0), (0, R * L - N))).reshape(B, R, L)
        needs_slice = True

    # Rows per tile: ~_TARGET_TILE_BYTES, multiple of 8, or the full row extent.
    tr_target = max(1, _TARGET_TILE_BYTES // (L * itemsize))
    if tr_target >= R:
        TR = R
    else:
        TR = max(8, (tr_target // 8) * 8)
    num_chunks = pl.cdiv(R, TR)
    # v7x has 2 TensorCores sharing HBM; keep >= 2 grid steps when possible.
    if B * num_chunks < 2 and R >= 16:
        TR = max(8, (pl.cdiv(R, 2) // 8) * 8)
        num_chunks = pl.cdiv(R, TR)

    grid = (B, num_chunks)

    def x_index_map(b, c, scale_ref):
        # Dropped sample: point every row-chunk at chunk 0.  Consecutive
        # identical block indices are deduped, skipping ~drop_prob of the reads.
        return (b, jnp.where(scale_ref[b] == 0.0, 0, c), 0)

    def o_index_map(b, c, scale_ref):
        return (b, c, 0)

    cost = pl.CostEstimate(
        flops=B * R * L,
        transcendentals=0,
        bytes_accessed=2 * B * R * L * itemsize,
    )

    out3 = pl.pallas_call(
        _drop_path_kernel,
        out_shape=jax.ShapeDtypeStruct((B, R, L), x.dtype),
        grid_spec=pltpu.PrefetchScalarGridSpec(
            num_scalar_prefetch=1,            # scale -> SMEM, first kernel arg
            grid=grid,
            in_specs=[pl.BlockSpec((1, TR, L), x_index_map)],
            out_specs=pl.BlockSpec((1, TR, L), o_index_map),
        ),
        compiler_params=pltpu.CompilerParams(
            dimension_semantics=("parallel", "parallel"),
            vmem_limit_bytes=_VMEM_LIMIT_BYTES,
        ),
        cost_estimate=cost,
        input_output_aliases=({1: 0} if donate_x else {}),
    )(scale, x3)

    if needs_slice:
        return out3.reshape(B, R * L)[:, :N].reshape(orig_shape)
    return out3.reshape(orig_shape)


class DropPath:
    """Drop paths (Stochastic Depth) per sample — Pallas/JAX version."""

    def __init__(self, drop_prob=None):
        self.drop_prob = drop_prob if drop_prob is not None else 0.0
        self.training = True

    def __call__(self, x, key=None):
        return drop_path_pallas(x, self.drop_prob, self.training, key=key)


def _reference(x, drop_prob, key):
    """Pure-JAX torch-style reference: x / keep_prob * floor(keep_prob + U)."""
    keep_prob = 1.0 - drop_prob
    B = x.shape[0]
    mask = jnp.floor(keep_prob + jax.random.uniform(key, (B,), dtype=jnp.float32))
    bshape = (B,) + (1,) * (x.ndim - 1)
    return (x / keep_prob) * mask.reshape(bshape)


if __name__ == "__main__":
    root = jax.random.PRNGKey(0)
    k_x, k_mask, k_x2, k_mask2, k_x3, k_mask3 = jax.random.split(root, 6)

    # --- Main case: clean shape, metadata-only reshapes ----------------------
    B, C, H, W = 2, 4, 16, 16
    x = jax.random.normal(k_x, (B, C, H, W), dtype=jnp.float32)
    drop_prob = 0.25
    module = DropPath(drop_prob=drop_prob)
    module.training = True
    y = jax.block_until_ready(module(x, key=k_mask))
    y_ref = _reference(x, drop_prob, k_mask)
    assert jnp.allclose(y, y_ref, atol=1e-5, rtol=1e-5), "mismatch vs torch formula"

    # --- Awkward shape: exercises the padded fallback path -------------------
    x2 = jax.random.normal(k_x2, (2, 3, 7, 5), dtype=jnp.float32)
    y2 = jax.block_until_ready(drop_path_pallas(x2, 0.25, True, key=k_mask2))
    y2_ref = _reference(x2, 0.25, k_mask2)
    assert jnp.allclose(y2, y2_ref, atol=1e-5, rtol=1e-5), "mismatch (padded path)"

    # --- High drop prob: exercises the dropped-sample (zero-write) branch ----
    x3 = jax.random.normal(k_x3, (4, 4, 16, 16), dtype=jnp.float32)
    y3 = jax.block_until_ready(drop_path_pallas(x3, 0.9, True, key=k_mask3))
    y3_ref = _reference(x3, 0.9, k_mask3)
    assert jnp.allclose(y3, y3_ref, atol=1e-5, rtol=1e-5), "mismatch (dropped samples)"

    # --- Eval mode / drop_prob == 0: identity ---------------------------------
    module_eval = DropPath(drop_prob=drop_prob)
    module_eval.training = False
    y_eval = jax.block_until_ready(module_eval(x))
    assert jnp.array_equal(y_eval, x), "eval mode must be identity"

    print("KERNEL_OK")
</pallas_src>

<mosaic_0001>
module attributes {stable_mosaic.version = 11 : i64} {
  func.func @_drop_path_kernel(%arg0: i32, %arg1: i32, %arg2: memref<2xf32, #tpu.memory_space<smem>>, %arg3: memref<1x2x512xf32, #tpu.memory_space<vmem>>, %arg4: memref<1x2x512xf32, #tpu.memory_space<vmem>>) attributes {dimension_semantics = [#tpu.dimension_semantics<parallel>, #tpu.dimension_semantics<parallel>], iteration_bounds = array<i64: 2, 1>, scalar_prefetch = 1 : i64, scratch_operands = 0 : i64, tpu.core_type = #tpu.core_type<tc>, window_params = [{transform_indices = @transform_0, window_bounds = array<i64: 1, 2, 512>}, {transform_indices = @transform_1, window_bounds = array<i64: 1, 2, 512>}]} {
    %0 = arith.index_cast %arg0 : i32 to index
    %1 = memref.load %arg2[%0] : memref<2xf32, #tpu.memory_space<smem>>
    %cst = arith.constant 0.000000e+00 : f32
    %2 = arith.cmpf oeq, %1, %cst : f32
    %3 = arith.extui %2 : i1 to i32
    %c0_i32 = arith.constant 0 : i32
    %4 = arith.cmpi ne, %3, %c0_i32 : i32
    scf.if %4 {
      %cst_2 = arith.constant 0.000000e+00 : f32
      %8 = vector.broadcast %cst_2 : f32 to vector<1x2x512xf32>
      %c0 = arith.constant 0 : index
      %c0_3 = arith.constant 0 : index
      %c0_4 = arith.constant 0 : index
      %9 = vector.load %arg4[%c0, %c0_3, %c0_4] : memref<1x2x512xf32, #tpu.memory_space<vmem>>, vector<1x2x512xf32>
      tpu.vector_store %arg4[%c0, %c0_3, %c0_4], %8 {strides = array<i32>} : memref<1x2x512xf32, #tpu.memory_space<vmem>>, vector<1x2x512xf32>,
    } else {
    }
    %cst_0 = arith.constant 0.000000e+00 : f32
    %5 = arith.cmpf one, %1, %cst_0 : f32
    %6 = arith.extui %5 : i1 to i32
    %c0_i32_1 = arith.constant 0 : i32
    %7 = arith.cmpi ne, %6, %c0_i32_1 : i32
    scf.if %7 {
      %c0 = arith.constant 0 : index
      %c0_2 = arith.constant 0 : index
      %c0_3 = arith.constant 0 : index
      %8 = vector.load %arg3[%c0, %c0_2, %c0_3] : memref<1x2x512xf32, #tpu.memory_space<vmem>>, vector<1x2x512xf32>
      %9 = vector.broadcast %1 : f32 to vector<1x2x512xf32>
      %10 = arith.mulf %8, %9 : vector<1x2x512xf32>
      %c0_4 = arith.constant 0 : index
      %c0_5 = arith.constant 0 : index
      %c0_6 = arith.constant 0 : index
      %11 = vector.load %arg4[%c0_4, %c0_5, %c0_6] : memref<1x2x512xf32, #tpu.memory_space<vmem>>, vector<1x2x512xf32>
      tpu.vector_store %arg4[%c0_4, %c0_5, %c0_6], %10 {strides = array<i32>} : memref<1x2x512xf32, #tpu.memory_space<vmem>>, vector<1x2x512xf32>,
    } else {
    }
    return
  }
  func.func @transform_0(%arg0: i32, %arg1: i32, %arg2: memref<2xf32, #tpu.memory_space<smem>>) -> (i32, i32, i32) {
    %0 = arith.index_cast %arg0 : i32 to index
    %1 = memref.load %arg2[%0] : memref<2xf32, #tpu.memory_space<smem>>
    %cst = arith.constant 0.000000e+00 : f32
    %2 = arith.cmpf oeq, %1, %cst : f32
    %c0_i32 = arith.constant 0 : i32
    %3 = arith.select %2, %c0_i32, %arg1 : i32
    %c0_i32_0 = arith.constant 0 : i32
    %c0_i32_1 = arith.constant 0 : i32
    return %arg0, %3, %c0_i32_0 : i32, i32, i32
  }
  func.func @transform_1(%arg0: i32, %arg1: i32, %arg2: memref<2xf32, #tpu.memory_space<smem>>) -> (i32, i32, i32) {
    %c0_i32 = arith.constant 0 : i32
    %c0_i32_0 = arith.constant 0 : i32
    return %arg0, %arg1, %c0_i32 : i32, i32, i32
  }
}

</mosaic_0001>

<llo_original>
// kernel: tpu_custom_call.1
$region0: #{tpu_custom_call.1}
  #allocation0 [shape = 'u32[]', space=smem, size = 0x4, offset = 0x4, fixed_abs, tag = 'smem constant byte address 0x4 - core index']
  #allocation1 [shape = 'u32[144,128]{1,0:T(1,128)}', space=vmem, size = 0x12000, scoped, tag = 'internal scratch']
  #allocation2 [shape = 's32[1]{0}', space=sflag, size = 0x4, scoped, tag = 'scoped memory for tpu_custom_call.1']
  #allocation3 [shape = 'u8[512]{0}', space=smem, size = 0x200, scoped, tag = 'prefetched SMEM operand 0']
  %s0 = inlined_call_operand.hbm [shape: f32[2], index: 0, kind: input, shape index: {}]
  %s1 = inlined_call_operand.hbm [shape: f32[2,2,512], index: 1, kind: input, shape index: {}]
  %s2 = inlined_call_operand.hbm [shape: f32[2,2,512], index: 2, kind: output, shape index: {}]
  %s3 = sld [smem:[#allocation0]]
  $region49: #{tpu_custom_call.1} parent=0
    _
  %s5 = ssub.s32 1, %s3
  %s6 = scalar_select 0, %s5, %s3
  %8 = dma.hbm_to_smem %s0, 16, [#allocation3], [#allocation2]
  %9 = dma.done [#allocation2], 16
  %10 = sfence
  $region1: #{tpu_custom_call.1} parent=0
    #allocation4 [shape = 'u8[8192]{0}', space=vmem, size = 0x2000, scoped, tag = 'input window, operand 1']
    #allocation5 [shape = 's32[2]{0}', space=sflag, size = 0x8, scoped, tag = 'scoped memory for tpu_custom_call.1']
    #allocation6 [shape = 's32[2]{0}', space=sflag, size = 0x8, scoped, tag = 'scoped memory for tpu_custom_call.1']
    #allocation7 [shape = 'u8[8192]{0}', space=vmem, size = 0x2000, scoped, tag = 'output window, operand 0']
    %11 = vsyncpa [#allocation5], 0
    %s12 = scalar_lea.sflag [#allocation5], 1
    %13 = vsyncpa %s12, 0
    %14 = vsyncpa [#allocation6], 0
    %s15 = scalar_lea.sflag [#allocation6], 1
    %16 = vsyncpa %s15, 0
    loop: start=0, step=1, limit=4
    $region2: #{tpu_custom_call.1} parent=1 // loop_pre_header
      _
    $region3: #{tpu_custom_call.1} parent=1 // loop_header
      %s18 = sphi 0, %s22
      %p19 = scmp.ge.s32.totalorder %s18, 4
      %s25 = sphi 0, %s37
      %s26 = sphi 0, %s33
      %s27 = sphi 0, %s25
      %s28 = sphi 0, %s26
      %s29 = sphi 0, %s27
      %s30 = sphi 0, %s28
      %s48 = sphi 0, %s50
      %s51 = sphi 0, %s48
      %s52 = sphi 0, %s51
      %s68 = sphi 0, %s52
      %s76 = sphi 0, %s78
      %s79 = sphi 0, %s76
      %s80 = sphi 0, %s79
      %s96 = sphi 0, %s80
    $region4: #{tpu_custom_call.1} parent=1 // loop_header_branch
      %21 = sbr.rel (%p19) target = $region8
    $region5: #{tpu_custom_call.1} parent=1 // loop_body
      %s23 = ssub.s32 %s18, 1
      %s24 = ssub.s32 %s18, 2
      %s31 = sadd.s32 1, %s26
      %p32 = scmp.ge.s32.totalorder %s31, 1
      %s33 = scalar_select %p32, 0, %s31
      %s34 = sadd.s32 1, %s25
      %s35 = scalar_select %p32, %s34, %s25
      %p36 = scmp.ge.s32.totalorder %s35, 2
      %s37 = scalar_select %p36, 0, %s35
      %s38 = sld [smem:[#allocation3 + %s25]]
      %p39 = scmp.eq.f32.partialorder %s38, 0.0
      %s40 = scalar_select %p39, 0, %s26
      %s41 = sld [smem:[#allocation3 + %s37]]
      %p42 = scmp.eq.f32.partialorder %s41, 0.0
      %s43 = scalar_select %p42, 0, %s33
      %s44 = ssub.s32 %s25, %s37
      %s45 = ssub.s32 %s40, %s43
      %s46 = sor.u32 %s44, %s45
      %p47 = scmp.eq.s32.totalorder %s46, 0
      %s49 = sadd.s32 %s48, 1
      %s50 = scalar_select %p47, %s48, %s49
      %p53 = pneg %p47
      %p54 = scmp.eq.s32.totalorder %s18, 1
      %p55 = por %p53, %p54
      %p56 = scmp.ne.s32.totalorder %s48, %s51
      %p57 = scmp.eq.s32.totalorder %s18, 0
      %p58 = por %p56, %p57
      %p59 = scmp.ne.s32.totalorder %s48, %s51
      %p60 = scmp.eq.s32.totalorder %s23, 1
      %p61 = por %p59, %p60
      %p62 = scmp.ne.s32.totalorder %s51, %s52
      %p63 = scmp.eq.s32.totalorder %s23, 0
      %p64 = por %p62, %p63
      %p65 = scmp.ne.s32.totalorder %s51, %s52
      %p66 = scmp.eq.s32.totalorder %s24, 1
      %p67 = por %p65, %p66
      %p69 = scmp.ne.s32.totalorder %s52, %s68
      %p70 = scmp.eq.s32.totalorder %s24, 0
      %p71 = por %p69, %p70
      %s72 = ssub.s32 %s25, %s37
      %s73 = ssub.s32 %s26, %s33
      %s74 = sor.u32 %s72, %s73
      %p75 = scmp.eq.s32.totalorder %s74, 0
      %s77 = sadd.s32 %s76, 1
      %s78 = scalar_select %p75, %s76, %s77
      %p81 = pneg %p75
      %p82 = scmp.eq.s32.totalorder %s18, 1
      %p83 = por %p81, %p82
      %p84 = scmp.ne.s32.totalorder %s76, %s79
      %p85 = scmp.eq.s32.totalorder %s18, 0
      %p86 = por %p84, %p85
      %p87 = scmp.ne.s32.totalorder %s76, %s79
      %p88 = scmp.eq.s32.totalorder %s23, 1
      %p89 = por %p87, %p88
      %p90 = scmp.ne.s32.totalorder %s79, %s80
      %p91 = scmp.eq.s32.totalorder %s23, 0
      %p92 = por %p90, %p91
      %p93 = scmp.ne.s32.totalorder %s79, %s80
      %p94 = scmp.eq.s32.totalorder %s24, 1
      %p95 = por %p93, %p94
      %p97 = scmp.ne.s32.totalorder %s80, %s96
      %p98 = scmp.eq.s32.totalorder %s24, 0
      %p99 = por %p97, %p98
      %p100 = scmp.le.s32.totalorder 1, %s18
      %p101 = scmp.lt.s32.totalorder %s18, 3
      %p102 = pnand %p100, %p101
      %p103 = pneg %p102
      // Predicated region
      $region9: #{tpu_custom_call.1} parent=5 // pred_check
        _
      $region10: #{tpu_custom_call.1} parent=5 // pred_check_branch
        %105 = sbr.rel (%p102) target = $region12
      $region11: #{tpu_custom_call.1} parent=5 // pred_region
        %s106 = ssub.s32 %s18, 1
      $region12: #{tpu_custom_call.1} parent=5 // pred_fallthru
        _
      %p107 = scmp.lt.s32.totalorder %s18, 2
      // Predicated region
      $region13: #{tpu_custom_call.1} parent=5 // pred_check
        %p108 = pneg %p107
      $region14: #{tpu_custom_call.1} parent=5 // pred_check_branch
        %110 = sbr.rel (%p108) target = $region16
      $region15: #{tpu_custom_call.1} parent=5 // pred_region
        // Predicated region
        $region17: #{tpu_custom_call.1} parent=15 // pred_check
          %p111 = pneg %p58
        $region18: #{tpu_custom_call.1} parent=15 // pred_check_branch
          %113 = sbr.rel (%p111) target = $region20
        $region19: #{tpu_custom_call.1} parent=15 // pred_region
          %s114 = sand.u32 %s48, 1
          %s115 = scalar_lea.sflag [#allocation5], %s114
          %s116 = sand.u32 %s48, 1
          %s117 = smul.addr %s116, 8
          %s118 = scalar_lea.vmem [#allocation4], %s117
          %s119 = sld [smem:[#allocation3 + %s25]]
          %p120 = scmp.eq.f32.partialorder %s119, 0.0
          %s121 = scalar_select %p120, 0, %s26
          %s123 = ssub.s32 128, 128
          %124 = vsyncadd %s115, %s123
          %s125 = smul.addr %s121, 4
          %s126 = smul.addr %s25, 4
          %s127 = sadd.s32 %s125, %s126
          %s128 = smul.addr %s127, 32
          %s129 = scalar_lea.hbm %s1, %s128
          %s131 = sshll.u32 %s118, 4
          %s132 = int_to_ptr.vmem [resolvable:$true] %s131
          %134 = dma.hbm_to_vmem [thread:$0]  %s129, 128, %s132, %s115
        $region20: #{tpu_custom_call.1} parent=15 // pred_fallthru
          _
      $region16: #{tpu_custom_call.1} parent=5 // pred_fallthru
        _
      %p135 = scmp.le.s32.totalorder 1, %s18
      %p136 = scmp.lt.s32.totalorder %s18, 3
      %p137 = pnand %p135, %p136
      %p138 = pneg %p137
      // Predicated region
      $region21: #{tpu_custom_call.1} parent=5 // pred_check
        _
      $region22: #{tpu_custom_call.1} parent=5 // pred_check_branch
        %140 = sbr.rel (%p137) target = $region24
      $region23: #{tpu_custom_call.1} parent=5 // pred_region
        %s141 = ssub.s32 %s18, 1
        %s142 = sand.u32 %s51, 1
        %s143 = scalar_lea.sflag [#allocation5], %s142
        %s144 = sand.u32 %s51, 1
        %s145 = smul.addr %s144, 8
        %s146 = scalar_lea.vmem [#allocation4], %s145
        // Predicated region
        $region25: #{tpu_custom_call.1} parent=23 // pred_check
          %p147 = pneg %p64
        $region26: #{tpu_custom_call.1} parent=23 // pred_check_branch
          %149 = sbr.rel (%p147) target = $region28
        $region27: #{tpu_custom_call.1} parent=23 // pred_region
          %150 = dma.done %s143, 128
        $region28: #{tpu_custom_call.1} parent=23 // pred_fallthru
          _
        %s151 = sand.u32 %s51, 1
        %s152 = scalar_lea.sflag [#allocation5], %s151
        %s153 = sand.u32 %s51, 1
        %s154 = smul.addr %s153, 8
        %s155 = scalar_lea.vmem [#allocation4], %s154
        %p156 = pneg %p64
        %p157 = pneg %p61
        %p158 = pneg %p92
        %p159 = pneg %p89
        %s160 = sand.u32 %s79, 1
        %s161 = scalar_lea.sflag [#allocation6], %s160
        %s162 = sand.u32 %s79, 1
        %s163 = smul.addr %s162, 8
        %s164 = scalar_lea.vmem [#allocation7], %s163
        %s165 = sld [smem:[#allocation3 + %s27]]
        %p166 = scmp.eq.f32.partialorder %s165, 0.0
        %s167 = scalar_select %p166, 0, %s28
        %s168 = sld [smem:[#allocation3 + %s27]]
        %p169 = scmp.eq.f32.partialorder %s168, 0.0
        // Predicated region
        $region29: #{tpu_custom_call.1} parent=23 // pred_check
          %p170 = pneg %p169
        $region30: #{tpu_custom_call.1} parent=23 // pred_check_branch
          %172 = sbr.rel (%p170) target = $region32
        $region31: #{tpu_custom_call.1} parent=23 // pred_region
          %173 = vst [vmem:[%s164] sm:$0xff] 0.0
        $region32: #{tpu_custom_call.1} parent=23 // pred_fallthru
          _
        %p174 = scmp.ne.f32.partialorder %s168, 0.0
        // Predicated region
        $region33: #{tpu_custom_call.1} parent=23 // pred_check
          %p175 = pneg %p174
        $region34: #{tpu_custom_call.1} parent=23 // pred_check_branch
          %177 = sbr.rel (%p175) target = $region36
        $region35: #{tpu_custom_call.1} parent=23 // pred_region
          %v178 = vld [vmem:[%s146] sm:$0xff]
          %v179 = vstv %s168
          %v180 = vmul.f32 %v178, %v179
          %181 = vst [vmem:[%s164] sm:$0xff] %v180
        $region36: #{tpu_custom_call.1} parent=23 // pred_fallthru
          _
        %s182 = sand.u32 %s79, 1
        %s183 = scalar_lea.sflag [#allocation6], %s182
        %s184 = sand.u32 %s79, 1
        %s185 = smul.addr %s184, 8
        %s186 = scalar_lea.vmem [#allocation7], %s185
        // Predicated region
        $region37: #{tpu_custom_call.1} parent=23 // pred_check
          %p187 = pneg %p89
        $region38: #{tpu_custom_call.1} parent=23 // pred_check_branch
          %189 = sbr.rel (%p187) target = $region40
        $region39: #{tpu_custom_call.1} parent=23 // pred_region
          %s191 = ssub.s32 128, 128
          %192 = vsyncadd %s183, %s191
          %s193 = smul.addr %s28, 4
          %s194 = smul.addr %s27, 4
          %s195 = sadd.s32 %s193, %s194
          %s196 = smul.addr %s195, 32
          %s197 = scalar_lea.hbm %s2, %s196
          %s199 = sshll.u32 %s186, 4
          %s200 = int_to_ptr.vmem [resolvable:$true] %s199
          %202 = dma.vmem_to_hbm [thread:$0]  %s200, 128, %s197, %s183
        $region40: #{tpu_custom_call.1} parent=23 // pred_fallthru
          _
      $region24: #{tpu_custom_call.1} parent=5 // pred_fallthru
        _
      %p203 = scmp.le.s32.totalorder 2, %s18
      // Predicated region
      $region41: #{tpu_custom_call.1} parent=5 // pred_check
        %p204 = pneg %p203
      $region42: #{tpu_custom_call.1} parent=5 // pred_check_branch
        %206 = sbr.rel (%p204) target = $region44
      $region43: #{tpu_custom_call.1} parent=5 // pred_region
        %s207 = ssub.s32 %s18, 2
        // Predicated region
        $region45: #{tpu_custom_call.1} parent=43 // pred_check
          %p208 = pneg %p95
        $region46: #{tpu_custom_call.1} parent=43 // pred_check_branch
          %210 = sbr.rel (%p208) target = $region48
        $region47: #{tpu_custom_call.1} parent=43 // pred_region
          %s211 = sand.u32 %s80, 1
          %s212 = scalar_lea.sflag [#allocation6], %s211
          %s213 = sand.u32 %s80, 1
          %s214 = smul.addr %s213, 8
          %s215 = scalar_lea.vmem [#allocation7], %s214
          %216 = dma.done %s212, 128
        $region48: #{tpu_custom_call.1} parent=43 // pred_fallthru
          _
      $region44: #{tpu_custom_call.1} parent=5 // pred_fallthru
        _
    $region6: #{tpu_custom_call.1} parent=1 // loop_footer
      %s22 = sadd.s32 1, %s18
    $region7: #{tpu_custom_call.1} parent=1 // loop_footer_branch
      %17 = sbr.rel target = $region3
    $region8: #{tpu_custom_call.1} parent=1 // loop_exit
      _
    %217 = vsyncpa [#allocation5], 1
    %s218 = scalar_lea.sflag [#allocation5], 1
    %219 = vsyncpa %s218, 1
    %220 = vsyncpa [#allocation6], 1
    %s221 = scalar_lea.sflag [#allocation6], 1
    %222 = vsyncpa %s221, 1

</llo_original>
